<compile_context>
chip_gen: v6e
topology: v6e:2x2x1
jax: 0.10.0
libtpu: 0.0.40
codegen_flags: <defaults>
</compile_context>

<pallas_src>
import functools

import jax
import jax.numpy as jnp
from jax.experimental import pallas as pl
from jax.experimental.pallas import tpu as pltpu

_EPS = 1e-15


def _sublane_multiple(dtype) -> int:
    """Packed sublane tile: 8 rows for 4-byte, 16 for 2-byte, 32 for 1-byte."""
    return max(8, 32 // jnp.dtype(dtype).itemsize)


def _wbce_kernel(yp_ref, yt_ref, out_ref, *, rows, row_tile, lane,
                 blocks_per_core, has_overhang):
    c = pl.program_id(0)   # core-split axis (CORE_PARALLEL on v7x)
    j = pl.program_id(1)   # streaming reduction axis ("arbitrary")

    # The per-core output block is resident across j; zero it once.
    @pl.when(j == 0)
    def _init():
        out_ref[...] = jnp.zeros_like(out_ref)

    yp = yp_ref[...].astype(jnp.float32)
    yt = yt_ref[...].astype(jnp.float32)
    eps = jnp.float32(_EPS)

    # Weight-free partial terms.  w0/w1 scaling, negation and the mean are
    # applied once in the wrapper (saves 2 muls + 1 add per element).  The two
    # logs stay on the EUP path (single-log/select would break soft labels).
    t0 = (1.0 - yt) * jnp.log(1.0 - yp + eps)
    t1 = yt * jnp.log(yp + eps)

    def _accumulate(a0, a1):
        if row_tile % 8 == 0:
            # Pure-VPU accumulation: fold rows onto the (8, lane) vreg shape;
            # the expensive cross-lane reduce is deferred to the XLA epilogue.
            out_ref[0, 0] += a0.reshape(row_tile // 8, 8, lane).sum(axis=0)
            out_ref[0, 1] += a1.reshape(row_tile // 8, 8, lane).sum(axis=0)
        else:
            # Tiny single-block case (rows < 8): one sublane reduce is cheap.
            out_ref[0, 0, 0:1, :] += a0.sum(axis=0, keepdims=True)
            out_ref[0, 1, 0:1, :] += a1.sum(axis=0, keepdims=True)

    if not has_overhang:
        # Every block is fully in-bounds: no mask anywhere.
        _accumulate(t0, t1)
    else:
        base_row = (c * blocks_per_core + j) * row_tile
        is_edge = base_row + row_tile > rows   # only trailing block(s)

        @pl.when(jnp.logical_not(is_edge))
        def _interior():
            _accumulate(t0, t1)

        @pl.when(is_edge)
        def _edge():
            rid = base_row + jax.lax.broadcasted_iota(
                jnp.int32, (row_tile, lane), 0)
            valid = rid < rows
            # jnp.where (select): NaN/Inf from unspecified overhang data never
            # leaks into the sums (a multiply-by-mask would propagate NaN).
            _accumulate(jnp.where(valid, t0, 0.0),
                        jnp.where(valid, t1, 0.0))


def _partial_sums_jax(yp, yt):
    yp = yp.astype(jnp.float32)
    yt = yt.astype(jnp.float32)
    s0 = jnp.sum((1.0 - yt) * jnp.log(1.0 - yp + _EPS))
    s1 = jnp.sum(yt * jnp.log(yp + _EPS))
    return s0, s1


def weighted_bce_loss(y_pred, y_true, class_weights, *,
                      row_tile=8192, lane=128, num_cores=1):
    """-mean(w0*(1-t)*log(1-p+eps) + w1*t*log(p+eps)) via a Pallas reduction.

    num_cores: keep 1 on single-TensorCore chips (v5e/v6e); set 2 on v7x for
    large inputs to shard the row range across both TensorCores.
    """
    assert y_pred.shape == y_true.shape
    total = int(y_pred.size)
    cw = jnp.asarray(class_weights, dtype=jnp.float32)

    yp_flat = jnp.ravel(y_pred)
    yt_flat = jnp.ravel(y_true)

    rows = total // lane
    main = rows * lane
    tail = total - main

    # <=127-element ragged remainder: tiny pure-JAX sum instead of a
    # whole-array HBM pad/copy just to make the size 128-divisible.
    if tail:
        s0_tail, s1_tail = _partial_sums_jax(yp_flat[main:], yt_flat[main:])
    else:
        s0_tail = s1_tail = jnp.float32(0.0)

    if rows == 0:
        s0, s1 = s0_tail, s1_tail
    else:
        # Zero-copy reshape in the common 128-divisible case; otherwise a
        # single prefix slice of the flat array.
        yp_main = yp_flat if tail == 0 else yp_flat[:main]
        yt_main = yt_flat if tail == 0 else yt_flat[:main]
        yp2 = yp_main.reshape(rows, lane)
        yt2 = yt_main.reshape(rows, lane)

        mult = max(_sublane_multiple(yp2.dtype), _sublane_multiple(yt2.dtype))

        if num_cores > 1 and rows < num_cores * mult:
            num_cores = 1   # not enough rows to split across cores

        def _plan(nc):
            if rows < mult:
                return rows, 1                       # single full-extent block
            target = min(max(row_tile, mult),
                         max(pl.cdiv(rows, nc), mult),
                         rows)
            rt_ = (target // mult) * mult
            return rt_, pl.cdiv(rows, nc * rt_)

        rt, bpc = _plan(num_cores)
        if num_cores > 1 and (num_cores - 1) * bpc * rt >= rows:
            num_cores = 1                            # avoid a fully-idle core
            rt, bpc = _plan(1)

        has_overhang = (num_cores * bpc * rt) != rows
        # Clamp block indices so no block window starts past the array; fully
        # redundant (clamped) blocks are masked to zero inside the kernel.
        max_block = pl.cdiv(rows, rt) - 1

        def _in_map(c, j, _bpc=bpc, _mb=max_block):
            return (jnp.minimum(c * _bpc + j, _mb), 0)

        kernel = functools.partial(
            _wbce_kernel, rows=rows, row_tile=rt, lane=lane,
            blocks_per_core=bpc, has_overhang=has_overhang)

        if num_cores > 1:
            dim_sems = (pltpu.CORE_PARALLEL, pltpu.ARBITRARY)
        else:
            dim_sems = (pltpu.ARBITRARY, pltpu.ARBITRARY)

        # TODO(synk): if a trace shows exposed DMA waits at large row_tile,
        # add pipeline_mode=pl.Buffered(3) to the two input BlockSpecs.
        parts = pl.pallas_call(
            kernel,
            out_shape=jax.ShapeDtypeStruct((num_cores, 2, 8, lane),
                                           jnp.float32),
            grid_spec=pltpu.PrefetchScalarGridSpec(
                num_scalar_prefetch=0,
                grid=(num_cores, bpc),
                in_specs=[
                    pl.BlockSpec((rt, lane), _in_map),
                    pl.BlockSpec((rt, lane), _in_map),
                ],
                out_specs=pl.BlockSpec((1, 2, 8, lane),
                                       lambda c, j: (c, 0, 0, 0)),
            ),
            compiler_params=pltpu.CompilerParams(
                dimension_semantics=dim_sems),
        )(yp2, yt2)

        # Cross-lane/sublane reduce of the tiny per-core accumulators in XLA.
        s0 = jnp.sum(parts[:, 0]) + s0_tail
        s1 = jnp.sum(parts[:, 1]) + s1_tail

    return -(cw[0] * s0 + cw[1] * s1) / jnp.float32(total)


def weighted_bce_loss_ref(y_pred, y_true, class_weights):
    """Pure-JAX reference mirroring the PyTorch module."""
    cw = jnp.asarray(class_weights, dtype=jnp.float32)
    yp = y_pred.astype(jnp.float32)
    yt = y_true.astype(jnp.float32)
    loss = (cw[0] * (1.0 - yt) * jnp.log(1.0 - yp + _EPS)
            + cw[1] * yt * jnp.log(yp + _EPS))
    return -jnp.mean(loss)


if __name__ == "__main__":
    key = jax.random.PRNGKey(0)
    k1, k2 = jax.random.split(key)

    # NCHW-shaped "predictions" and binary targets.
    shape = (2, 4, 16, 16)   # 2048 elements = 16 rows x 128 lanes (zero-copy)
    y_pred = jax.nn.sigmoid(jax.random.normal(k1, shape, dtype=jnp.float32))
    y_true = jax.random.bernoulli(k2, p=0.3, shape=shape).astype(jnp.float32)

    # Deterministic "parameters": the class weights from __init__.
    class_weights = jnp.array([0.3, 0.7], dtype=jnp.float32)

    loss_fn = jax.jit(weighted_bce_loss)
    out = jax.block_until_ready(loss_fn(y_pred, y_true, class_weights))

    ref = weighted_bce_loss_ref(y_pred, y_true, class_weights)
    assert jnp.allclose(out, ref, rtol=1e-5, atol=1e-6), (out, ref)

    print("KERNEL_OK")
</pallas_src>

<mosaic_0001>
module attributes {stable_mosaic.version = 11 : i64} {
  func.func @_wbce_kernel(%arg0: i32, %arg1: i32, %arg2: memref<16x128xf32, #tpu.memory_space<vmem>>, %arg3: memref<16x128xf32, #tpu.memory_space<vmem>>, %arg4: memref<1x2x8x128xf32, #tpu.memory_space<vmem>>) attributes {dimension_semantics = [#tpu.dimension_semantics<arbitrary>, #tpu.dimension_semantics<arbitrary>], iteration_bounds = array<i64: 1, 1>, scalar_prefetch = 0 : i64, scratch_operands = 0 : i64, tpu.core_type = #tpu.core_type<tc>, window_params = [{transform_indices = @transform_0, window_bounds = array<i64: 16, 128>}, {transform_indices = @transform_1, window_bounds = array<i64: 16, 128>}, {transform_indices = @transform_2, window_bounds = array<i64: 1, 2, 8, 128>}]} {
    %c0_i32 = arith.constant 0 : i32
    %0 = arith.cmpi eq, %arg1, %c0_i32 : i32
    %1 = arith.extui %0 : i1 to i32
    %c0_i32_0 = arith.constant 0 : i32
    %2 = arith.cmpi ne, %1, %c0_i32_0 : i32
    scf.if %2 {
      %cst_24 = arith.constant 0.000000e+00 : f32
      %33 = vector.broadcast %cst_24 : f32 to vector<1x2x8x128xf32>
      %c0_25 = arith.constant 0 : index
      %c0_26 = arith.constant 0 : index
      %c0_27 = arith.constant 0 : index
      %c0_28 = arith.constant 0 : index
      %34 = vector.load %arg4[%c0_25, %c0_26, %c0_27, %c0_28] : memref<1x2x8x128xf32, #tpu.memory_space<vmem>>, vector<1x2x8x128xf32>
      tpu.vector_store %arg4[%c0_25, %c0_26, %c0_27, %c0_28], %33 {strides = array<i32>} : memref<1x2x8x128xf32, #tpu.memory_space<vmem>>, vector<1x2x8x128xf32>,
    } else {
    }
    %c0 = arith.constant 0 : index
    %c0_1 = arith.constant 0 : index
    %3 = vector.load %arg2[%c0, %c0_1] : memref<16x128xf32, #tpu.memory_space<vmem>>, vector<16x128xf32>
    %c0_2 = arith.constant 0 : index
    %c0_3 = arith.constant 0 : index
    %4 = vector.load %arg3[%c0_2, %c0_3] : memref<16x128xf32, #tpu.memory_space<vmem>>, vector<16x128xf32>
    %cst = arith.constant 1.000000e+00 : f32
    %5 = vector.broadcast %cst : f32 to vector<16x128xf32>
    %6 = arith.subf %5, %4 : vector<16x128xf32>
    %cst_4 = arith.constant 1.000000e+00 : f32
    %7 = vector.broadcast %cst_4 : f32 to vector<16x128xf32>
    %8 = arith.subf %7, %3 : vector<16x128xf32>
    %cst_5 = arith.constant 1.000000e-15 : f32
    %9 = vector.broadcast %cst_5 : f32 to vector<16x128xf32>
    %10 = arith.addf %8, %9 : vector<16x128xf32>
    %11 = math.log %10 : vector<16x128xf32>
    %12 = arith.mulf %6, %11 : vector<16x128xf32>
    %cst_6 = arith.constant 1.000000e-15 : f32
    %13 = vector.broadcast %cst_6 : f32 to vector<16x128xf32>
    %14 = arith.addf %3, %13 : vector<16x128xf32>
    %15 = math.log %14 : vector<16x128xf32>
    %16 = arith.mulf %4, %15 : vector<16x128xf32>
    %c0_7 = arith.constant 0 : index
    %c0_8 = arith.constant 0 : index
    %c0_9 = arith.constant 0 : index
    %c0_10 = arith.constant 0 : index
    %17 = vector.load %arg4[%c0_7, %c0_8, %c0_9, %c0_10] : memref<1x2x8x128xf32, #tpu.memory_space<vmem>>, vector<1x1x8x128xf32>
    %18 = vector.shape_cast %17 : vector<1x1x8x128xf32> to vector<8x128xf32>
    %19 = vector.shape_cast %12 : vector<16x128xf32> to vector<2x8x128xf32>
    %cst_11 = arith.constant dense<0.000000e+00> : vector<8x128xf32>
    %20 = vector.multi_reduction <add>, %19, %cst_11 [0] : vector<2x8x128xf32> to vector<8x128xf32>
    %21 = arith.addf %18, %20 : vector<8x128xf32>
    %c0_12 = arith.constant 0 : index
    %c0_13 = arith.constant 0 : index
    %c0_14 = arith.constant 0 : index
    %c0_15 = arith.constant 0 : index
    %22 = vector.load %arg4[%c0_12, %c0_13, %c0_14, %c0_15] : memref<1x2x8x128xf32, #tpu.memory_space<vmem>>, vector<1x1x8x128xf32>
    %23 = vector.shape_cast %22 : vector<1x1x8x128xf32> to vector<8x128xf32>
    %24 = vector.shape_cast %21 : vector<8x128xf32> to vector<1x1x8x128xf32>
    tpu.vector_store %arg4[%c0_12, %c0_13, %c0_14, %c0_15], %24 {strides = array<i32>} : memref<1x2x8x128xf32, #tpu.memory_space<vmem>>, vector<1x1x8x128xf32>,
    %c0_16 = arith.constant 0 : index
    %c1 = arith.constant 1 : index
    %c0_17 = arith.constant 0 : index
    %c0_18 = arith.constant 0 : index
    %25 = vector.load %arg4[%c0_16, %c1, %c0_17, %c0_18] : memref<1x2x8x128xf32, #tpu.memory_space<vmem>>, vector<1x1x8x128xf32>
    %26 = vector.shape_cast %25 : vector<1x1x8x128xf32> to vector<8x128xf32>
    %27 = vector.shape_cast %16 : vector<16x128xf32> to vector<2x8x128xf32>
    %cst_19 = arith.constant dense<0.000000e+00> : vector<8x128xf32>
    %28 = vector.multi_reduction <add>, %27, %cst_19 [0] : vector<2x8x128xf32> to vector<8x128xf32>
    %29 = arith.addf %26, %28 : vector<8x128xf32>
    %c0_20 = arith.constant 0 : index
    %c1_21 = arith.constant 1 : index
    %c0_22 = arith.constant 0 : index
    %c0_23 = arith.constant 0 : index
    %30 = vector.load %arg4[%c0_20, %c1_21, %c0_22, %c0_23] : memref<1x2x8x128xf32, #tpu.memory_space<vmem>>, vector<1x1x8x128xf32>
    %31 = vector.shape_cast %30 : vector<1x1x8x128xf32> to vector<8x128xf32>
    %32 = vector.shape_cast %29 : vector<8x128xf32> to vector<1x1x8x128xf32>
    tpu.vector_store %arg4[%c0_20, %c1_21, %c0_22, %c0_23], %32 {strides = array<i32>} : memref<1x2x8x128xf32, #tpu.memory_space<vmem>>, vector<1x1x8x128xf32>,
    return
  }
  func.func @transform_0(%arg0: i32, %arg1: i32) -> (i32, i32) {
    %c1_i32 = arith.constant 1 : i32
    %0 = arith.muli %arg0, %c1_i32 : i32
    %1 = arith.addi %0, %arg1 : i32
    %c0_i32 = arith.constant 0 : i32
    %2 = arith.minsi %1, %c0_i32 : i32
    %c0_i32_0 = arith.constant 0 : i32
    %c0_i32_1 = arith.constant 0 : i32
    return %2, %c0_i32_0 : i32, i32
  }
  func.func @transform_1(%arg0: i32, %arg1: i32) -> (i32, i32) {
    %c1_i32 = arith.constant 1 : i32
    %0 = arith.muli %arg0, %c1_i32 : i32
    %1 = arith.addi %0, %arg1 : i32
    %c0_i32 = arith.constant 0 : i32
    %2 = arith.minsi %1, %c0_i32 : i32
    %c0_i32_0 = arith.constant 0 : i32
    %c0_i32_1 = arith.constant 0 : i32
    return %2, %c0_i32_0 : i32, i32
  }
  func.func @transform_2(%arg0: i32, %arg1: i32) -> (i32, i32, i32, i32) {
    %c0_i32 = arith.constant 0 : i32
    %c0_i32_0 = arith.constant 0 : i32
    %c0_i32_1 = arith.constant 0 : i32
    %c0_i32_2 = arith.constant 0 : i32
    return %arg0, %c0_i32, %c0_i32_0, %c0_i32_1 : i32, i32, i32, i32
  }
}

</mosaic_0001>

<llo_original>
// kernel: weighted_bce_loss.1
$region0: #{weighted_bce_loss.1}
  #allocation0 [shape = 'u32[]', space=smem, size = 0x4, offset = 0x4, fixed_abs, tag = 'smem constant byte address 0x4 - core index']
  #allocation1 [shape = 'u32[144,128]{1,0:T(1,128)}', space=vmem, size = 0x12000, scoped, tag = 'internal scratch']
  %s0 = inlined_call_operand.vmem [shape: f32[16,128], index: 0, kind: input, shape index: {}]
  %s1 = inlined_call_operand.vmem [shape: f32[16,128], index: 1, kind: input, shape index: {}]
  %s2 = inlined_call_operand.vmem [shape: f32[1,2,8,128], index: 2, kind: output, shape index: {}]
  %s3 = sld [smem:[#allocation0]]
  $region22: #{weighted_bce_loss.1} parent=0
    _
  %s5 = ssub.s32 1, %s3
  %s6 = scalar_select 0, %s5, %s3
  // Predicated region
  $region2: #{weighted_bce_loss.1} parent=0 // pred_check
    _
  $region3: #{weighted_bce_loss.1} parent=0 // pred_check_branch
    %8 = sbr.rel (0) target = $region5
  $region4: #{weighted_bce_loss.1} parent=0 // pred_region
    %s9 = sadd.s32 0, 0
    %p10 = scmp.lt.s32.totalorder %s9, 0
    %s11 = scalar_select %p10, %s9, 0
    %s12 = smul.u32 2, %s11
    %p13 = scmp.lt.s32.totalorder %s12, 1
    %s14 = scalar_select %p13, %s12, 1
    %s15 = smul.addr %s14, 8
    %s16 = scalar_lea.vmem %s0, %s15
    %s17 = sadd.s32 0, 0
    %p18 = scmp.lt.s32.totalorder %s17, 0
    %s19 = scalar_select %p18, %s17, 0
    %s20 = smul.u32 2, %s19
  $region5: #{weighted_bce_loss.1} parent=0 // pred_fallthru
    _
  // Predicated region
  $region6: #{weighted_bce_loss.1} parent=0 // pred_check
    _
  $region7: #{weighted_bce_loss.1} parent=0 // pred_check_branch
    %22 = sbr.rel (0) target = $region9
  $region8: #{weighted_bce_loss.1} parent=0 // pred_region
    %s23 = sadd.s32 0, 0
    %p24 = scmp.lt.s32.totalorder %s23, 0
    %s25 = scalar_select %p24, %s23, 0
    %s26 = smul.u32 2, %s25
    %p27 = scmp.lt.s32.totalorder %s26, 1
    %s28 = scalar_select %p27, %s26, 1
    %s29 = smul.addr %s28, 8
    %s30 = scalar_lea.vmem %s1, %s29
    %s31 = sadd.s32 0, 0
    %p32 = scmp.lt.s32.totalorder %s31, 0
    %s33 = scalar_select %p32, %s31, 0
    %s34 = smul.u32 2, %s33
  $region9: #{weighted_bce_loss.1} parent=0 // pred_fallthru
    _
  %s35 = sadd.s32 0, 0
  %p36 = scmp.lt.s32.totalorder %s35, 0
  %s37 = scalar_select %p36, %s35, 0
  %s38 = smul.u32 2, %s37
  %p39 = scmp.lt.s32.totalorder %s38, 1
  %s40 = scalar_select %p39, %s38, 1
  %s41 = smul.addr %s40, 8
  %s42 = scalar_lea.vmem %s0, %s41
  %s43 = sadd.s32 0, 0
  %p44 = scmp.lt.s32.totalorder %s43, 0
  %s45 = scalar_select %p44, %s43, 0
  %s46 = smul.u32 2, %s45
  %p47 = scmp.lt.s32.totalorder %s46, 1
  %s48 = scalar_select %p47, %s46, 1
  %s49 = smul.addr %s48, 8
  %s50 = scalar_lea.vmem %s1, %s49
  %s51 = sadd.s32 0, 0
  %p52 = scmp.lt.s32.totalorder %s51, 0
  %s53 = scalar_select %p52, %s51, 0
  %s54 = smul.u32 2, %s53
  %p55 = scmp.lt.s32.totalorder %s54, 1
  %s56 = scalar_select %p55, %s54, 1
  %s57 = smul.addr %s56, 8
  %s58 = scalar_lea.vmem %s0, %s57
  %s59 = sadd.s32 0, 0
  %p60 = scmp.lt.s32.totalorder %s59, 0
  %s61 = scalar_select %p60, %s59, 0
  %s62 = smul.u32 2, %s61
  %s63 = sadd.s32 0, 0
  %p64 = scmp.lt.s32.totalorder %s63, 0
  %s65 = scalar_select %p64, %s63, 0
  %s66 = smul.u32 2, %s65
  %p67 = scmp.lt.s32.totalorder %s66, 1
  %s68 = scalar_select %p67, %s66, 1
  %s69 = smul.addr %s68, 8
  %s70 = scalar_lea.vmem %s1, %s69
  %s71 = sadd.s32 0, 0
  %p72 = scmp.lt.s32.totalorder %s71, 0
  %s73 = scalar_select %p72, %s71, 0
  %s74 = smul.u32 2, %s73
  %p75 = scmp.eq.s32.totalorder 0, 0
  // Predicated region
  $region10: #{weighted_bce_loss.1} parent=0 // pred_check
    %p76 = pneg %p75
  $region11: #{weighted_bce_loss.1} parent=0 // pred_check_branch
    %78 = sbr.rel (%p76) target = $region13
  $region12: #{weighted_bce_loss.1} parent=0 // pred_region
    %79 = vst [vmem:[%s2] sm:$0xff] 0.0
    %80 = vst [vmem:[%s2 + $0x8] sm:$0xff] 0.0
  $region13: #{weighted_bce_loss.1} parent=0 // pred_fallthru
    _
  %v81 = vld [vmem:[%s58] sm:$0xff]
  %v82 = vld [vmem:[%s58 + $0x8] sm:$0xff]
  %v83 = vld [vmem:[%s70] sm:$0xff]
  %v84 = vld [vmem:[%s70 + $0x8] sm:$0xff]
  %v85 = vsub.f32 1.0, %v83
  %v86 = vsub.f32 1.0, %v84
  %v87 = vsub.f32 1.0, %v81
  %v88 = vsub.f32 1.0, %v82
  %v89 = vadd.f32 %v87, 1e-15
  %v90 = vadd.f32 %v88, 1e-15
  %v91 = vlog2.pop %v89
  %v92 = vmul.f32 %v91, 0.6931472
  %v93 = vlog2.pop %v90
  %v94 = vmul.f32 %v93, 0.6931472
  %v95 = vmul.f32 %v85, %v92
  %v96 = vmul.f32 %v86, %v94
  %v97 = vadd.f32 %v81, 1e-15
  %v98 = vadd.f32 %v82, 1e-15
  %v99 = vlog2.pop %v97
  %v100 = vmul.f32 %v99, 0.6931472
  %v101 = vlog2.pop %v98
  %v102 = vmul.f32 %v101, 0.6931472
  %v103 = vmul.f32 %v83, %v100
  %v104 = vmul.f32 %v84, %v102
  %v105 = vld [vmem:[%s2] sm:$0xff]
  %v106 = vadd.f32 %v95, %v96
  %v107 = vadd.f32 %v105, %v106
  %108 = vst [vmem:[%s2] sm:$0xff] %v107
  %s109 = scalar_lea.vmem %s2, 8
  %v110 = vld [vmem:[%s109] sm:$0xff]
  %v111 = vadd.f32 %v103, %v104
  %v112 = vadd.f32 %v110, %v111
  %113 = vst [vmem:[%s109] sm:$0xff] %v112
  // Predicated region
  $region14: #{weighted_bce_loss.1} parent=0 // pred_check
    _
  $region15: #{weighted_bce_loss.1} parent=0 // pred_check_branch
    %115 = sbr.rel (0) target = $region17
  $region16: #{weighted_bce_loss.1} parent=0 // pred_region
    _
  $region17: #{weighted_bce_loss.1} parent=0 // pred_fallthru
    _
  // Predicated region
  $region18: #{weighted_bce_loss.1} parent=0 // pred_check
    _
  $region19: #{weighted_bce_loss.1} parent=0 // pred_check_branch
    %117 = sbr.rel (0) target = $region21
  $region20: #{weighted_bce_loss.1} parent=0 // pred_region
    _
  $region21: #{weighted_bce_loss.1} parent=0 // pred_fallthru
    _

</llo_original>
